<compile_context>
chip_gen: v6e
topology: v6e:2x2x1
jax: 0.10.0
libtpu: 0.0.40
codegen_flags: <defaults>
</compile_context>

<pallas_src>
import functools

import jax
import jax.numpy as jnp
from jax import lax
from jax.experimental import pallas as pl
from jax.experimental.pallas import tpu as pltpu

# Large finite negative used for masked scores: exp(-1e30 - rowmax) == 0.0 in f32, so
# partially-masked rows match the torch -inf semantics exactly, while fully-masked rows
# stay finite (uniform) instead of producing (-inf) - (-inf) = NaN.
_MASK_VALUE = -1e30


def _make_kernel(with_mask: bool, with_attn: bool):
    """Build the kernel body for the (mask?, attn-output?) variant."""

    def kernel(*refs):
        idx = 0
        mask_ref = None
        if with_mask:
            mask_ref = refs[idx]
            idx += 1
        q_ref, k_ref, v_ref = refs[idx], refs[idx + 1], refs[idx + 2]
        idx += 3
        o_ref = refs[idx]
        idx += 1
        attn_ref = refs[idx] if with_attn else None

        q = q_ref[...]          # (TQ, D)  in the input dtype (bf16 stays bf16)
        k = k_ref[...]          # (Lk, D)
        v = v_ref[...]          # (Lk, Dv)

        # q @ k^T without materializing a transpose: contract the last dims directly
        # (native "transposed-B" MXU form), accumulate in f32.
        s = lax.dot_general(
            q, k,
            dimension_numbers=(((1,), (1,)), ((), ())),
            preferred_element_type=jnp.float32,
        )                                                        # (TQ, Lk) f32

        if with_mask:
            s = jnp.where(mask_ref[...], _MASK_VALUE, s)

        # Exact row-wise softmax (full Lk row per q tile).
        m = jnp.max(s, axis=-1, keepdims=True)
        e = jnp.exp(s - m)
        denom = jnp.sum(e, axis=-1, keepdims=True)
        # Exact reciprocal keeps the returned attention matrix bit-faithful to softmax;
        # pl.reciprocal(denom, approx=True) (EUP vrcp) is available if tolerance allows.
        p = e * pl.reciprocal(denom, approx=False)

        if with_attn:
            attn_ref[...] = p.astype(attn_ref.dtype)

        # dropout_rate = 0.0 in the reference module -> identity, skipped.
        o_ref[...] = jnp.dot(
            p.astype(v.dtype), v, preferred_element_type=jnp.float32
        ).astype(o_ref.dtype)

    return kernel


def _pick_tq(lq: int) -> int:
    """Query-tile size: full Lq when small, otherwise a 256/128-aligned tile."""
    if lq <= 256:
        return lq
    for t in (256, 128):
        if lq % t == 0:
            return t
    return 256  # pl.cdiv handles a ragged final tile (OOB writes are masked)


@functools.partial(jax.jit, static_argnames=("return_attn", "tq"))
def dot_product_attention(q, k, v, attention_mask=None, *, return_attn=True, tq=None):
    """Forward pass of DotProductAttention.

    q: (B, Lq, D), k: (B, Lk, D), v: (B, Lk, Dv),
    attention_mask: optional bool (B, Lq, Lk) (True = masked out).
    Returns (output, soft_attention) like the torch module, or just output when
    return_attn=False (skips the O(Lq*Lk) attention writeback to HBM).
    """
    B, Lq, D = q.shape
    _, Lk, Dv = v.shape
    assert k.shape == (B, Lk, D)

    with_mask = attention_mask is not None
    TQ = _pick_tq(Lq) if tq is None else tq
    grid = (B, pl.cdiv(Lq, TQ))

    in_specs = []
    args = []
    if with_mask:
        in_specs.append(pl.BlockSpec((None, TQ, Lk), lambda b, qi: (b, qi, 0)))
        args.append(attention_mask)
    in_specs += [
        pl.BlockSpec((None, TQ, D), lambda b, qi: (b, qi, 0)),   # q tile
        pl.BlockSpec((None, Lk, D), lambda b, qi: (b, 0, 0)),    # full K (resident over qi)
        pl.BlockSpec((None, Lk, Dv), lambda b, qi: (b, 0, 0)),   # full V (resident over qi)
    ]
    args += [q, k, v]

    out_shapes = [jax.ShapeDtypeStruct((B, Lq, Dv), q.dtype)]
    out_specs = [pl.BlockSpec((None, TQ, Dv), lambda b, qi: (b, qi, 0))]
    if return_attn:
        out_shapes.append(jax.ShapeDtypeStruct((B, Lq, Lk), q.dtype))
        out_specs.append(pl.BlockSpec((None, TQ, Lk), lambda b, qi: (b, qi, 0)))

    # Rough per-step VMEM estimate (double-buffered in/out + f32 scores scratch);
    # keep the scoped limit comfortably under v7x's 64 MiB.
    itemsize = jnp.dtype(q.dtype).itemsize
    in_bytes = (TQ * D + Lk * D + Lk * Dv) * itemsize
    if with_mask:
        in_bytes += TQ * max(Lk, 128)                 # bool mask tile (lane-padded)
    out_bytes = TQ * Dv * itemsize + (TQ * Lk * itemsize if return_attn else 0)
    est = 2 * (in_bytes + out_bytes) + 2 * TQ * Lk * 4
    vmem_limit = int(min(max(2 * est, 32 * 1024 * 1024), 56 * 1024 * 1024))

    fn = pl.pallas_call(
        _make_kernel(with_mask, return_attn),
        out_shape=tuple(out_shapes),
        grid=grid,
        in_specs=in_specs,
        out_specs=tuple(out_specs),
        compiler_params=pltpu.CompilerParams(
            dimension_semantics=("parallel", "parallel"),
            vmem_limit_bytes=vmem_limit,
        ),
    )
    outs = fn(*args)
    if return_attn:
        return outs[0], outs[1]
    return outs[0]


def _reference(q, k, v, mask=None):
    s = jnp.einsum("bqd,bkd->bqk", q, k)
    if mask is not None:
        s = jnp.where(mask, -jnp.inf, s)
    p = jax.nn.softmax(s, axis=-1)
    return jnp.einsum("bqk,bkd->bqd", p, v), p


if __name__ == "__main__":
    key = jax.random.PRNGKey(0)
    kq, kk, kv, km = jax.random.split(key, 4)

    B, Lq, Lk, D, Dv = 2, 8, 8, 32, 32
    q = jax.random.normal(kq, (B, Lq, D), dtype=jnp.float32)
    k = jax.random.normal(kk, (B, Lk, D), dtype=jnp.float32)
    v = jax.random.normal(kv, (B, Lk, Dv), dtype=jnp.float32)

    # --- unmasked path: returns (out, attn) like the torch module ---
    out, attn = dot_product_attention(q, k, v)
    jax.block_until_ready((out, attn))
    ref_out, ref_attn = _reference(q, k, v)
    assert jnp.allclose(out, ref_out, atol=1e-4, rtol=1e-4)
    assert jnp.allclose(attn, ref_attn, atol=1e-5, rtol=1e-5)

    # --- masked path (at least one unmasked key per row, since the torch ref NaNs otherwise) ---
    mask = jax.random.bernoulli(km, 0.25, (B, Lq, Lk))
    mask = mask.at[:, :, 0].set(False)
    out_m, attn_m = dot_product_attention(q, k, v, mask)
    jax.block_until_ready((out_m, attn_m))
    ref_out_m, ref_attn_m = _reference(q, k, v, mask)
    assert jnp.allclose(out_m, ref_out_m, atol=1e-4, rtol=1e-4)
    assert jnp.allclose(attn_m, ref_attn_m, atol=1e-5, rtol=1e-5)

    # --- output-only path: skips the O(Lq*Lk) attention writeback ---
    out_only = dot_product_attention(q, k, v, return_attn=False)
    jax.block_until_ready(out_only)
    assert jnp.allclose(out_only, ref_out, atol=1e-4, rtol=1e-4)

    # --- bf16 smoke test: matmuls stay in bf16 (fast MXU path) with f32 accumulation ---
    qb, kb, vb = (x.astype(jnp.bfloat16) for x in (q, k, v))
    out_b, attn_b = dot_product_attention(qb, kb, vb)
    jax.block_until_ready((out_b, attn_b))
    assert jnp.allclose(out_b.astype(jnp.float32), ref_out, atol=1e-1, rtol=1e-1)

    print("KERNEL_OK")
</pallas_src>

<mosaic_0001>
module attributes {stable_mosaic.version = 11 : i64} {
  func.func @kernel(%arg0: i32, %arg1: i32, %arg2: memref<1x8x32xf32, #tpu.memory_space<vmem>>, %arg3: memref<1x8x32xf32, #tpu.memory_space<vmem>>, %arg4: memref<1x8x32xf32, #tpu.memory_space<vmem>>, %arg5: memref<1x8x32xf32, #tpu.memory_space<vmem>>, %arg6: memref<1x8x8xf32, #tpu.memory_space<vmem>>) attributes {dimension_semantics = [#tpu.dimension_semantics<parallel>, #tpu.dimension_semantics<parallel>], iteration_bounds = array<i64: 2, 1>, scalar_prefetch = 0 : i64, scratch_operands = 0 : i64, tpu.core_type = #tpu.core_type<tc>, window_params = [{transform_indices = @transform_0, window_bounds = array<i64: 1, 8, 32>}, {transform_indices = @transform_1, window_bounds = array<i64: 1, 8, 32>}, {transform_indices = @transform_2, window_bounds = array<i64: 1, 8, 32>}, {transform_indices = @transform_3, window_bounds = array<i64: 1, 8, 32>}, {transform_indices = @transform_4, window_bounds = array<i64: 1, 8, 8>}]} {
    %c0 = arith.constant 0 : index
    %c0_0 = arith.constant 0 : index
    %c0_1 = arith.constant 0 : index
    %0 = vector.load %arg2[%c0, %c0_0, %c0_1] : memref<1x8x32xf32, #tpu.memory_space<vmem>>, vector<1x8x32xf32>
    %1 = vector.shape_cast %0 : vector<1x8x32xf32> to vector<8x32xf32>
    %c0_2 = arith.constant 0 : index
    %c0_3 = arith.constant 0 : index
    %c0_4 = arith.constant 0 : index
    %2 = vector.load %arg3[%c0_2, %c0_3, %c0_4] : memref<1x8x32xf32, #tpu.memory_space<vmem>>, vector<1x8x32xf32>
    %3 = vector.shape_cast %2 : vector<1x8x32xf32> to vector<8x32xf32>
    %c0_5 = arith.constant 0 : index
    %c0_6 = arith.constant 0 : index
    %c0_7 = arith.constant 0 : index
    %4 = vector.load %arg4[%c0_5, %c0_6, %c0_7] : memref<1x8x32xf32, #tpu.memory_space<vmem>>, vector<1x8x32xf32>
    %5 = vector.shape_cast %4 : vector<1x8x32xf32> to vector<8x32xf32>
    %cst = arith.constant dense<0.000000e+00> : vector<8x8xf32>
    %6 = tpu.matmul %1, %3, %cst {dimension_numbers = #tpu.dot_dimension_numbers<[1], [1], [0], [0], [0, 0, 1, 0], [], []>} : vector<8x32xf32>, vector<8x32xf32>, vector<8x8xf32> -> vector<8x8xf32>
    %cst_8 = arith.constant dense<0xFF800000> : vector<8xf32>
    %7 = vector.multi_reduction <maximumf>, %6, %cst_8 [1] : vector<8x8xf32> to vector<8xf32>
    %8 = vector.shape_cast %7 : vector<8xf32> to vector<8x1xf32>
    %9 = vector.broadcast %8 : vector<8x1xf32> to vector<8x8xf32>
    %10 = arith.subf %6, %9 : vector<8x8xf32>
    %11 = math.exp %10 : vector<8x8xf32>
    %cst_9 = arith.constant dense<0.000000e+00> : vector<8xf32>
    %12 = vector.multi_reduction <add>, %11, %cst_9 [1] : vector<8x8xf32> to vector<8xf32>
    %13 = vector.shape_cast %12 : vector<8xf32> to vector<8x1xf32>
    %14 = tpu.reciprocal %13 : vector<8x1xf32> -> vector<8x1xf32>
    %15 = vector.broadcast %14 : vector<8x1xf32> to vector<8x8xf32>
    %16 = arith.mulf %11, %15 : vector<8x8xf32>
    %c0_10 = arith.constant 0 : index
    %c0_11 = arith.constant 0 : index
    %c0_12 = arith.constant 0 : index
    %17 = vector.load %arg6[%c0_10, %c0_11, %c0_12] : memref<1x8x8xf32, #tpu.memory_space<vmem>>, vector<1x8x8xf32>
    %18 = vector.shape_cast %17 : vector<1x8x8xf32> to vector<8x8xf32>
    %19 = vector.shape_cast %16 : vector<8x8xf32> to vector<1x8x8xf32>
    tpu.vector_store %arg6[%c0_10, %c0_11, %c0_12], %19 {strides = array<i32>} : memref<1x8x8xf32, #tpu.memory_space<vmem>>, vector<1x8x8xf32>,
    %cst_13 = arith.constant dense<0.000000e+00> : vector<8x32xf32>
    %20 = tpu.matmul %16, %5, %cst_13 {dimension_numbers = #tpu.dot_dimension_numbers<[1], [0], [0], [1], [0, 0, 1, 1], [], []>} : vector<8x8xf32>, vector<8x32xf32>, vector<8x32xf32> -> vector<8x32xf32>
    %c0_14 = arith.constant 0 : index
    %c0_15 = arith.constant 0 : index
    %c0_16 = arith.constant 0 : index
    %21 = vector.load %arg5[%c0_14, %c0_15, %c0_16] : memref<1x8x32xf32, #tpu.memory_space<vmem>>, vector<1x8x32xf32>
    %22 = vector.shape_cast %21 : vector<1x8x32xf32> to vector<8x32xf32>
    %23 = vector.shape_cast %20 : vector<8x32xf32> to vector<1x8x32xf32>
    tpu.vector_store %arg5[%c0_14, %c0_15, %c0_16], %23 {strides = array<i32>} : memref<1x8x32xf32, #tpu.memory_space<vmem>>, vector<1x8x32xf32>,
    return
  }
  func.func @transform_0(%arg0: i32, %arg1: i32) -> (i32, i32, i32) {
    %c0_i32 = arith.constant 0 : i32
    %c0_i32_0 = arith.constant 0 : i32
    return %arg0, %arg1, %c0_i32 : i32, i32, i32
  }
  func.func @transform_1(%arg0: i32, %arg1: i32) -> (i32, i32, i32) {
    %c0_i32 = arith.constant 0 : i32
    %c0_i32_0 = arith.constant 0 : i32
    %c0_i32_1 = arith.constant 0 : i32
    return %arg0, %c0_i32, %c0_i32_0 : i32, i32, i32
  }
  func.func @transform_2(%arg0: i32, %arg1: i32) -> (i32, i32, i32) {
    %c0_i32 = arith.constant 0 : i32
    %c0_i32_0 = arith.constant 0 : i32
    %c0_i32_1 = arith.constant 0 : i32
    return %arg0, %c0_i32, %c0_i32_0 : i32, i32, i32
  }
  func.func @transform_3(%arg0: i32, %arg1: i32) -> (i32, i32, i32) {
    %c0_i32 = arith.constant 0 : i32
    %c0_i32_0 = arith.constant 0 : i32
    return %arg0, %arg1, %c0_i32 : i32, i32, i32
  }
  func.func @transform_4(%arg0: i32, %arg1: i32) -> (i32, i32, i32) {
    %c0_i32 = arith.constant 0 : i32
    %c0_i32_0 = arith.constant 0 : i32
    return %arg0, %arg1, %c0_i32 : i32, i32, i32
  }
}

</mosaic_0001>

<llo_original>
// kernel: dot_product_attention.1
$region0: #{dot_product_attention.1}
  #allocation0 [shape = 'u32[]', space=smem, size = 0x4, offset = 0x4, fixed_abs, tag = 'smem constant byte address 0x4 - core index']
  #allocation1 [shape = 'u32[144,128]{1,0:T(1,128)}', space=vmem, size = 0x12000, scoped, tag = 'internal scratch']
  %s0 = inlined_call_operand.hbm [shape: f32[2,8,32], index: 0, kind: input, shape index: {}]
  %s1 = inlined_call_operand.hbm [shape: f32[2,8,32], index: 1, kind: input, shape index: {}]
  %s2 = inlined_call_operand.hbm [shape: f32[2,8,32], index: 2, kind: input, shape index: {}]
  %s3 = inlined_call_operand.hbm [shape: f32[2,8,32], index: 3, kind: output, shape index: {0}]
  %s4 = inlined_call_operand.hbm [shape: f32[2,8,8], index: 4, kind: output, shape index: {1}]
  %5 = xla_tuple %s3, %s4
  %s6 = sld [smem:[#allocation0]]
  $region65: #{dot_product_attention.1} parent=0
    _
  %s8 = ssub.s32 1, %s6
  %s9 = scalar_select 0, %s8, %s6
  $region1: #{dot_product_attention.1} parent=0
    #allocation2 [shape = 'u8[8192]{0}', space=vmem, size = 0x2000, scoped, tag = 'input window, operand 0']
    #allocation3 [shape = 's32[2]{0}', space=sflag, size = 0x8, scoped, tag = 'scoped memory for dot_product_attention.1']
    #allocation4 [shape = 's32[2]{0}', space=sflag, size = 0x8, scoped, tag = 'scoped memory for dot_product_attention.1']
    #allocation5 [shape = 'u8[8192]{0}', space=vmem, size = 0x2000, scoped, tag = 'input window, operand 1']
    #allocation6 [shape = 's32[2]{0}', space=sflag, size = 0x8, scoped, tag = 'scoped memory for dot_product_attention.1']
    #allocation7 [shape = 'u8[8192]{0}', space=vmem, size = 0x2000, scoped, tag = 'input window, operand 2']
    #allocation8 [shape = 'u8[8192]{0}', space=vmem, size = 0x2000, scoped, tag = 'output window, operand 0']
    #allocation9 [shape = 'u8[8192]{0}', space=vmem, size = 0x2000, scoped, tag = 'output window, operand 1']
    #allocation10 [shape = 's32[2]{0}', space=sflag, size = 0x8, scoped, tag = 'scoped memory for dot_product_attention.1']
    %10 = vsyncpa [#allocation3], 0
    %s11 = scalar_lea.sflag [#allocation3], 1
    %12 = vsyncpa %s11, 0
    %13 = vsyncpa [#allocation6], 0
    %s14 = scalar_lea.sflag [#allocation6], 1
    %15 = vsyncpa %s14, 0
    %16 = vsyncpa [#allocation4], 0
    %s17 = scalar_lea.sflag [#allocation4], 1
    %18 = vsyncpa %s17, 0
    %19 = vsyncpa [#allocation10], 0
    %s20 = scalar_lea.sflag [#allocation10], 1
    %21 = vsyncpa %s20, 0
    loop: start=0, step=1, limit=4
    $region2: #{dot_product_attention.1} parent=1 // loop_pre_header
      _
    $region3: #{dot_product_attention.1} parent=1 // loop_header
      %s23 = sphi 0, %s27
      %p24 = scmp.ge.s32.totalorder %s23, 4
      %s30 = sphi 0, %s42
      %s31 = sphi 0, %s38
      %s32 = sphi 0, %s30
      %s33 = sphi 0, %s31
      %s34 = sphi 0, %s32
      %s35 = sphi 0, %s33
      %s47 = sphi 0, %s49
      %s50 = sphi 0, %s47
      %s51 = sphi 0, %s50
      %s67 = sphi 0, %s51
      %s73 = sphi 0, %s75
      %s76 = sphi 0, %s73
      %s77 = sphi 0, %s76
      %s93 = sphi 0, %s77
      %s99 = sphi 0, %s101
      %s102 = sphi 0, %s99
      %s103 = sphi 0, %s102
      %s119 = sphi 0, %s103
      %s127 = sphi 0, %s129
      %s130 = sphi 0, %s127
      %s131 = sphi 0, %s130
      %s147 = sphi 0, %s131
      %s155 = sphi 0, %s157
      %s158 = sphi 0, %s155
      %s159 = sphi 0, %s158
      %s175 = sphi 0, %s159
    $region4: #{dot_product_attention.1} parent=1 // loop_header_branch
      %26 = sbr.rel (%p24) target = $region8
    $region5: #{dot_product_attention.1} parent=1 // loop_body
      %s28 = ssub.s32 %s23, 1
      %s29 = ssub.s32 %s23, 2
      %s36 = sadd.s32 1, %s31
      %p37 = scmp.ge.s32.totalorder %s36, 1
      %s38 = scalar_select %p37, 0, %s36
      %s39 = sadd.s32 1, %s30
      %s40 = scalar_select %p37, %s39, %s30
      %p41 = scmp.ge.s32.totalorder %s40, 2
      %s42 = scalar_select %p41, 0, %s40
      %s43 = ssub.s32 %s30, %s42
      %s44 = ssub.s32 %s31, %s38
      %s45 = sor.u32 %s43, %s44
      %p46 = scmp.eq.s32.totalorder %s45, 0
      %s48 = sadd.s32 %s47, 1
      %s49 = scalar_select %p46, %s47, %s48
      %p52 = pneg %p46
      %p53 = scmp.eq.s32.totalorder %s23, 1
      %p54 = por %p52, %p53
      %p55 = scmp.ne.s32.totalorder %s47, %s50
      %p56 = scmp.eq.s32.totalorder %s23, 0
      %p57 = por %p55, %p56
      %p58 = scmp.ne.s32.totalorder %s47, %s50
      %p59 = scmp.eq.s32.totalorder %s28, 1
      %p60 = por %p58, %p59
      %p61 = scmp.ne.s32.totalorder %s50, %s51
      %p62 = scmp.eq.s32.totalorder %s28, 0
      %p63 = por %p61, %p62
      %p64 = scmp.ne.s32.totalorder %s50, %s51
      %p65 = scmp.eq.s32.totalorder %s29, 1
      %p66 = por %p64, %p65
      %p68 = scmp.ne.s32.totalorder %s51, %s67
      %p69 = scmp.eq.s32.totalorder %s29, 0
      %p70 = por %p68, %p69
      %s71 = ssub.s32 %s30, %s42
      %p72 = scmp.eq.s32.totalorder %s71, 0
      %s74 = sadd.s32 %s73, 1
      %s75 = scalar_select %p72, %s73, %s74
      %p78 = pneg %p72
      %p79 = scmp.eq.s32.totalorder %s23, 1
      %p80 = por %p78, %p79
      %p81 = scmp.ne.s32.totalorder %s73, %s76
      %p82 = scmp.eq.s32.totalorder %s23, 0
      %p83 = por %p81, %p82
      %p84 = scmp.ne.s32.totalorder %s73, %s76
      %p85 = scmp.eq.s32.totalorder %s28, 1
      %p86 = por %p84, %p85
      %p87 = scmp.ne.s32.totalorder %s76, %s77
      %p88 = scmp.eq.s32.totalorder %s28, 0
      %p89 = por %p87, %p88
      %p90 = scmp.ne.s32.totalorder %s76, %s77
      %p91 = scmp.eq.s32.totalorder %s29, 1
      %p92 = por %p90, %p91
      %p94 = scmp.ne.s32.totalorder %s77, %s93
      %p95 = scmp.eq.s32.totalorder %s29, 0
      %p96 = por %p94, %p95
      %s97 = ssub.s32 %s30, %s42
      %p98 = scmp.eq.s32.totalorder %s97, 0
      %s100 = sadd.s32 %s99, 1
      %s101 = scalar_select %p98, %s99, %s100
      %p104 = pneg %p98
      %p105 = scmp.eq.s32.totalorder %s23, 1
      %p106 = por %p104, %p105
      %p107 = scmp.ne.s32.totalorder %s99, %s102
      %p108 = scmp.eq.s32.totalorder %s23, 0
      %p109 = por %p107, %p108
      %p110 = scmp.ne.s32.totalorder %s99, %s102
      %p111 = scmp.eq.s32.totalorder %s28, 1
      %p112 = por %p110, %p111
      %p113 = scmp.ne.s32.totalorder %s102, %s103
      %p114 = scmp.eq.s32.totalorder %s28, 0
      %p115 = por %p113, %p114
      %p116 = scmp.ne.s32.totalorder %s102, %s103
      %p117 = scmp.eq.s32.totalorder %s29, 1
      %p118 = por %p116, %p117
      %p120 = scmp.ne.s32.totalorder %s103, %s119
      %p121 = scmp.eq.s32.totalorder %s29, 0
      %p122 = por %p120, %p121
      %s123 = ssub.s32 %s30, %s42
      %s124 = ssub.s32 %s31, %s38
      %s125 = sor.u32 %s123, %s124
      %p126 = scmp.eq.s32.totalorder %s125, 0
      %s128 = sadd.s32 %s127, 1
      %s129 = scalar_select %p126, %s127, %s128
      %p132 = pneg %p126
      %p133 = scmp.eq.s32.totalorder %s23, 1
      %p134 = por %p132, %p133
      %p135 = scmp.ne.s32.totalorder %s127, %s130
      %p136 = scmp.eq.s32.totalorder %s23, 0
      %p137 = por %p135, %p136
      %p138 = scmp.ne.s32.totalorder %s127, %s130
      %p139 = scmp.eq.s32.totalorder %s28, 1
      %p140 = por %p138, %p139
      %p141 = scmp.ne.s32.totalorder %s130, %s131
      %p142 = scmp.eq.s32.totalorder %s28, 0
      %p143 = por %p141, %p142
      %p144 = scmp.ne.s32.totalorder %s130, %s131
      %p145 = scmp.eq.s32.totalorder %s29, 1
      %p146 = por %p144, %p145
      %p148 = scmp.ne.s32.totalorder %s131, %s147
      %p149 = scmp.eq.s32.totalorder %s29, 0
      %p150 = por %p148, %p149
      %s151 = ssub.s32 %s30, %s42
      %s152 = ssub.s32 %s31, %s38
      %s153 = sor.u32 %s151, %s152
      %p154 = scmp.eq.s32.totalorder %s153, 0
      %s156 = sadd.s32 %s155, 1
      %s157 = scalar_select %p154, %s155, %s156
      %p160 = pneg %p154
      %p161 = scmp.eq.s32.totalorder %s23, 1
      %p162 = por %p160, %p161
      %p163 = scmp.ne.s32.totalorder %s155, %s158
      %p164 = scmp.eq.s32.totalorder %s23, 0
      %p165 = por %p163, %p164
      %p166 = scmp.ne.s32.totalorder %s155, %s158
      %p167 = scmp.eq.s32.totalorder %s28, 1
      %p168 = por %p166, %p167
      %p169 = scmp.ne.s32.totalorder %s158, %s159
      %p170 = scmp.eq.s32.totalorder %s28, 0
      %p171 = por %p169, %p170
      %p172 = scmp.ne.s32.totalorder %s158, %s159
      %p173 = scmp.eq.s32.totalorder %s29, 1
      %p174 = por %p172, %p173
      %p176 = scmp.ne.s32.totalorder %s159, %s175
      %p177 = scmp.eq.s32.totalorder %s29, 0
      %p178 = por %p176, %p177
      %p179 = scmp.le.s32.totalorder 1, %s23
      %p180 = scmp.lt.s32.totalorder %s23, 3
      %p181 = pnand %p179, %p180
      %p182 = pneg %p181
      // Predicated region
      $region9: #{dot_product_attention.1} parent=5 // pred_check
        _
      $region10: #{dot_product_attention.1} parent=5 // pred_check_branch
        %184 = sbr.rel (%p181) target = $region12
      $region11: #{dot_product_attention.1} parent=5 // pred_region
        %s185 = ssub.s32 %s23, 1
      $region12: #{dot_product_attention.1} parent=5 // pred_fallthru
        _
      %p186 = scmp.lt.s32.totalorder %s23, 2
      // Predicated region
      $region13: #{dot_product_attention.1} parent=5 // pred_check
        %p187 = pneg %p186
      $region14: #{dot_product_attention.1} parent=5 // pred_check_branch
        %189 = sbr.rel (%p187) target = $region16
      $region15: #{dot_product_attention.1} parent=5 // pred_region
        // Predicated region
        $region17: #{dot_product_attention.1} parent=15 // pred_check
          %p190 = pneg %p57
        $region18: #{dot_product_attention.1} parent=15 // pred_check_branch
          %192 = sbr.rel (%p190) target = $region20
        $region19: #{dot_product_attention.1} parent=15 // pred_region
          %s193 = sand.u32 %s47, 1
          %s194 = scalar_lea.sflag [#allocation3], %s193
          %s195 = sand.u32 %s47, 1
          %s196 = smul.addr %s195, 8
          %s197 = scalar_lea.vmem [#allocation2], %s196
          %s199 = ssub.s32 128, 128
          %200 = vsyncadd %s194, %s199
          %s201 = sadd.s32 %s31, %s30
          %s202 = smul.addr %s201, 128
          %s203 = scalar_lea.hbm %s0, %s202
          %s205 = sshll.u32 %s197, 4
          %s206 = int_to_ptr.vmem [resolvable:$true] %s205
          %208 = dma.hbm_to_vmem [thread:$0]  %s203, 128, %s206, %s194
        $region20: #{dot_product_attention.1} parent=15 // pred_fallthru
          _
        // Predicated region
        $region21: #{dot_product_attention.1} parent=15 // pred_check
          %p209 = pneg %p83
        $region22: #{dot_product_attention.1} parent=15 // pred_check_branch
          %211 = sbr.rel (%p209) target = $region24
        $region23: #{dot_product_attention.1} parent=15 // pred_region
          %s212 = sand.u32 %s23, 1
          %s213 = scalar_lea.sflag [#allocation6], %s212
          %s214 = sand.u32 %s73, 1
          %s215 = smul.addr %s214, 8
          %s216 = scalar_lea.vmem [#allocation5], %s215
          %s218 = ssub.s32 128, 128
          %219 = vsyncadd %s213, %s218
          %s220 = smul.addr %s30, 128
          %s221 = scalar_lea.hbm %s1, %s220
          %s223 = sshll.u32 %s216, 4
          %s224 = int_to_ptr.vmem [resolvable:$true] %s223
          %226 = dma.hbm_to_vmem [thread:$0]  %s221, 128, %s224, %s213
        $region24: #{dot_product_attention.1} parent=15 // pred_fallthru
          _
        // Predicated region
        $region25: #{dot_product_attention.1} parent=15 // pred_check
          %p227 = pneg %p109
        $region26: #{dot_product_attention.1} parent=15 // pred_check_branch
          %229 = sbr.rel (%p227) target = $region28
        $region27: #{dot_product_attention.1} parent=15 // pred_region
          %s230 = sand.u32 %s23, 1
          %s231 = scalar_lea.sflag [#allocation6], %s230
          %s232 = sand.u32 %s99, 1
          %s233 = smul.addr %s232, 8
          %s234 = scalar_lea.vmem [#allocation7], %s233
          %s236 = ssub.s32 128, 128
          %237 = vsyncadd %s231, %s236
          %s238 = smul.addr %s30, 128
          %s239 = scalar_lea.hbm %s2, %s238
          %s241 = sshll.u32 %s234, 4
          %s242 = int_to_ptr.vmem [resolvable:$true] %s241
          %244 = dma.hbm_to_vmem [thread:$0]  %s239, 128, %s242, %s231
        $region28: #{dot_product_attention.1} parent=15 // pred_fallthru
          _
      $region16: #{dot_product_attention.1} parent=5 // pred_fallthru
        _
      %p245 = scmp.le.s32.totalorder 1, %s23
      %p246 = scmp.lt.s32.totalorder %s23, 3
      %p247 = pnand %p245, %p246
      %p248 = pneg %p247
      // Predicated region
      $region29: #{dot_product_attention.1} parent=5 // pred_check
        _
      $region30: #{dot_product_attention.1} parent=5 // pred_check_branch
        %250 = sbr.rel (%p247) target = $region32
      $region31: #{dot_product_attention.1} parent=5 // pred_region
        %s251 = ssub.s32 %s23, 1
        %s252 = sand.u32 %s50, 1
        %s253 = scalar_lea.sflag [#allocation3], %s252
        %s254 = sand.u32 %s50, 1
        %s255 = smul.addr %s254, 8
        %s256 = scalar_lea.vmem [#allocation2], %s255
        // Predicated region
        $region33: #{dot_product_attention.1} parent=31 // pred_check
          %p257 = pneg %p63
        $region34: #{dot_product_attention.1} parent=31 // pred_check_branch
          %259 = sbr.rel (%p257) target = $region36
        $region35: #{dot_product_attention.1} parent=31 // pred_region
          %260 = dma.done %s253, 128
        $region36: #{dot_product_attention.1} parent=31 // pred_fallthru
          _
        %s261 = sand.u32 %s28, 1
        %s262 = scalar_lea.sflag [#allocation6], %s261
        %s263 = sand.u32 %s76, 1
        %s264 = smul.addr %s263, 8
        %s265 = scalar_lea.vmem [#allocation5], %s264
        // Predicated region
        $region37: #{dot_product_attention.1} parent=31 // pred_check
          %p266 = pneg %p89
        $region38: #{dot_product_attention.1} parent=31 // pred_check_branch
          %268 = sbr.rel (%p266) target = $region40
        $region39: #{dot_product_attention.1} parent=31 // pred_region
          %269 = dma.done %s262, 128
        $region40: #{dot_product_attention.1} parent=31 // pred_fallthru
          _
        %s270 = sand.u32 %s28, 1
        %s271 = scalar_lea.sflag [#allocation6], %s270
        %s272 = sand.u32 %s102, 1
        %s273 = smul.addr %s272, 8
        %s274 = scalar_lea.vmem [#allocation7], %s273
        // Predicated region
        $region41: #{dot_product_attention.1} parent=31 // pred_check
          %p275 = pneg %p115
        $region42: #{dot_product_attention.1} parent=31 // pred_check_branch
          %277 = sbr.rel (%p275) target = $region44
        $region43: #{dot_product_attention.1} parent=31 // pred_region
          %278 = dma.done %s271, 128
        $region44: #{dot_product_attention.1} parent=31 // pred_fallthru
          _
        %s279 = sand.u32 %s50, 1
        %s280 = scalar_lea.sflag [#allocation3], %s279
        %s281 = sand.u32 %s50, 1
        %s282 = smul.addr %s281, 8
        %s283 = scalar_lea.vmem [#allocation2], %s282
        %p284 = pneg %p63
        %p285 = pneg %p60
        %s286 = sand.u32 %s28, 1
        %s287 = scalar_lea.sflag [#allocation6], %s286
        %s288 = sand.u32 %s76, 1
        %s289 = smul.addr %s288, 8
        %s290 = scalar_lea.vmem [#allocation5], %s289
        %p291 = pneg %p89
        %p292 = pneg %p86
        %s293 = sand.u32 %s28, 1
        %s294 = scalar_lea.sflag [#allocation6], %s293
        %s295 = sand.u32 %s102, 1
        %s296 = smul.addr %s295, 8
        %s297 = scalar_lea.vmem [#allocation7], %s296
        %p298 = pneg %p115
        %p299 = pneg %p112
        %p300 = pneg %p143
        %p301 = pneg %p140
        %s302 = sand.u32 %s130, 1
        %s303 = scalar_lea.sflag [#allocation4], %s302
        %s304 = sand.u32 %s130, 1
        %s305 = smul.addr %s304, 8
        %s306 = scalar_lea.vmem [#allocation8], %s305
        %p307 = pneg %p171
        %p308 = pneg %p168
        %s309 = sand.u32 %s158, 1
        %s310 = scalar_lea.sflag [#allocation10], %s309
        %s311 = sand.u32 %s158, 1
        %s312 = smul.addr %s311, 8
        %s313 = scalar_lea.vmem [#allocation9], %s312
        %v314 = vld [vmem:[%s256] sm:$0xff]
        %v315 = vld [vmem:[%s265] sm:$0xff]
        %v316 = vld [vmem:[%s274] sm:$0xff]
        %vm317 = vcmask 261120
        %v319 = vsel %vm317, %v314, 0
        %v322 = vsel %vm317, %v315, 0
        %324 = vmatprep.subr.mxu0 0.0
        %325 = vmatpush1.xpose.msra.mxu0 0.0
        %326 = vmatprep.subr.mxu0 0.0
        %327 = vmatpush1.xpose.msra.mxu0 0.0
        %328 = vmatprep.subr.mxu0 0.0
        %329 = vmatpush1.xpose.msra.mxu0 0.0
        %330 = vmatprep.subr.mxu0 0.0
        %331 = vmatpush1.xpose.msra.mxu0 0.0
        %332 = vmatprep.subr.mxu0 0.0
        %333 = vmatpush1.xpose.msra.mxu0 0.0
        %334 = vmatprep.subr.mxu0 0.0
        %335 = vmatpush1.xpose.msra.mxu0 0.0
        %336 = vmatprep.subr.mxu0 0.0
        %337 = vmatpush1.xpose.msra.mxu0 0.0
        %338 = vmatprep.subr.mxu0 0.0
        %339 = vmatpush1.xpose.msra.mxu0 0.0
        %340 = vmatprep.subr.mxu0 0.0
        %341 = vmatpush1.xpose.msra.mxu0 0.0
        %342 = vmatprep.subr.mxu0 0.0
        %343 = vmatpush1.xpose.msra.mxu0 0.0
        %344 = vmatprep.subr.mxu0 0.0
        %345 = vmatpush1.xpose.msra.mxu0 0.0
        %346 = vmatprep.subr.mxu0 0.0
        %347 = vmatpush1.xpose.msra.mxu0 0.0
        %348 = vmatprep.subr.mxu0 0.0
        %349 = vmatpush1.xpose.msra.mxu0 0.0
        %350 = vmatprep.subr.mxu0 0.0
        %351 = vmatpush1.xpose.msra.mxu0 0.0
        %352 = vmatprep.subr.mxu0 0.0
        %353 = vmatpush1.xpose.msra.mxu0 0.0
        %354 = vmatprep.subr.mxu0 0.0
        %355 = vmatpush1.xpose.msra.mxu0 %v322
        %356 = vmatprep.subr.mxu0 0.0
        %357 = vmatpush2.xpose.msra.mxu0 0.0
        %358 = vmatprep.subr.mxu0 0.0
        %359 = vmatpush2.xpose.msra.mxu0 0.0
        %360 = vmatprep.subr.mxu0 0.0
        %361 = vmatpush2.xpose.msra.mxu0 0.0
        %362 = vmatprep.subr.mxu0 0.0
        %363 = vmatpush2.xpose.msra.mxu0 0.0
        %364 = vmatprep.subr.mxu0 0.0
        %365 = vmatpush2.xpose.msra.mxu0 0.0
        %366 = vmatprep.subr.mxu0 0.0
        %367 = vmatpush2.xpose.msra.mxu0 0.0
        %368 = vmatprep.subr.mxu0 0.0
        %369 = vmatpush2.xpose.msra.mxu0 0.0
        %370 = vmatprep.subr.mxu0 0.0
        %371 = vmatpush2.xpose.msra.mxu0 0.0
        %372 = vmatprep.subr.mxu0 0.0
        %373 = vmatpush2.xpose.msra.mxu0 0.0
        %374 = vmatprep.subr.mxu0 0.0
        %375 = vmatpush2.xpose.msra.mxu0 0.0
        %376 = vmatprep.subr.mxu0 0.0
        %377 = vmatpush2.xpose.msra.mxu0 0.0
        %378 = vmatprep.subr.mxu0 0.0
        %379 = vmatpush2.xpose.msra.mxu0 0.0
        %380 = vmatprep.subr.mxu0 0.0
        %381 = vmatpush2.xpose.msra.mxu0 0.0
        %382 = vmatprep.subr.mxu0 0.0
        %383 = vmatpush2.xpose.msra.mxu0 0.0
        %384 = vmatprep.subr.mxu0 0.0
        %385 = vmatpush2.xpose.msra.mxu0 0.0
        %386 = vmatprep.subr.mxu0 0.0
        %387 = vmatpush2.xpose.msra.mxu0 0.0
        %388 = vmatprep.mubr.f32.mxu0 0.0
        %389 = vmatmul.mubr.f32.gmra.mxu0 %v319
        %v390 = vpop.f32.mrf.mxu0
        %v391 = vadd.f32 0.0, %v390
        %v392 = vpop.f32.mrf.mxu0
        %393 = vdwg.mxu0
        %vm394 = vcmask 64512
        %v395 = vsel %vm394, %v391, -inf
        %396 = vmax.xlane.f32.xlu0 %v395
        %v397 = vpop.xlane.xlu0 %396
        %v398 = vsub.f32 %v391, %v397
        %v399 = vmul.f32 %v398, 1.442695
        %v400 = vpow.pop %v399
        %v401 = vsel %vm394, %v400, 0.0
        %402 = vadd.xlane.f32.xlu0 %v401
        %v403 = vpop.xlane.xlu0 %402
        %v404 = vrcp.pop %v403
        %v405 = vmul.f32 %v400, %v404
        %406 = vst.msk [vmem:[%s313] sm:$0xff] %vm394, %v405
        %v408 = vsel %vm394, %v405, 0
        %410 = vmatprep.subr.mxu0 0.0
        %411 = vmatpush1.msra.mxu0 0.0
        %412 = vmatprep.subr.mxu0 0.0
        %413 = vmatpush1.msra.mxu0 0.0
        %414 = vmatprep.subr.mxu0 0.0
        %415 = vmatpush1.msra.mxu0 0.0
        %416 = vmatprep.subr.mxu0 0.0
        %417 = vmatpush1.msra.mxu0 0.0
        %418 = vmatprep.subr.mxu0 0.0
        %419 = vmatpush1.msra.mxu0 0.0
        %420 = vmatprep.subr.mxu0 0.0
        %421 = vmatpush1.msra.mxu0 0.0
        %422 = vmatprep.subr.mxu0 0.0
        %423 = vmatpush1.msra.mxu0 0.0
        %424 = vmatprep.subr.mxu0 0.0
        %425 = vmatpush1.msra.mxu0 0.0
        %426 = vmatprep.subr.mxu0 0.0
        %427 = vmatpush1.msra.mxu0 0.0
        %428 = vmatprep.subr.mxu0 0.0
        %429 = vmatpush1.msra.mxu0 0.0
        %430 = vmatprep.subr.mxu0 0.0
        %431 = vmatpush1.msra.mxu0 0.0
        %432 = vmatprep.subr.mxu0 0.0
        %433 = vmatpush1.msra.mxu0 0.0
        %434 = vmatprep.subr.mxu0 0.0
        %435 = vmatpush1.msra.mxu0 0.0
        %436 = vmatprep.subr.mxu0 0.0
        %437 = vmatpush1.msra.mxu0 0.0
        %438 = vmatprep.subr.mxu0 0.0
        %439 = vmatpush1.msra.mxu0 0.0
        %440 = vmatprep.subr.mxu0 0.0
        %441 = vmatpush1.msra.mxu0 %v316
        %442 = vmatprep.subr.mxu0 0.0
        %443 = vmatpush2.msra.mxu0 0.0
        %444 = vmatprep.subr.mxu0 0.0
        %445 = vmatpush2.msra.mxu0 0.0
        %446 = vmatprep.subr.mxu0 0.0
        %447 = vmatpush2.msra.mxu0 0.0
        %448 = vmatprep.subr.mxu0 0.0
        %449 = vmatpush2.msra.mxu0 0.0
        %450 = vmatprep.subr.mxu0 0.0
        %451 = vmatpush2.msra.mxu0 0.0
        %452 = vmatprep.subr.mxu0 0.0
        %453 = vmatpush2.msra.mxu0 0.0
        %454 = vmatprep.subr.mxu0 0.0
        %455 = vmatpush2.msra.mxu0 0.0
        %456 = vmatprep.subr.mxu0 0.0
        %457 = vmatpush2.msra.mxu0 0.0
        %458 = vmatprep.subr.mxu0 0.0
        %459 = vmatpush2.msra.mxu0 0.0
        %460 = vmatprep.subr.mxu0 0.0
        %461 = vmatpush2.msra.mxu0 0.0
        %462 = vmatprep.subr.mxu0 0.0
        %463 = vmatpush2.msra.mxu0 0.0
        %464 = vmatprep.subr.mxu0 0.0
        %465 = vmatpush2.msra.mxu0 0.0
        %466 = vmatprep.subr.mxu0 0.0
        %467 = vmatpush2.msra.mxu0 0.0
        %468 = vmatprep.subr.mxu0 0.0
        %469 = vmatpush2.msra.mxu0 0.0
        %470 = vmatprep.subr.mxu0 0.0
        %471 = vmatpush2.msra.mxu0 0.0
        %472 = vmatprep.subr.mxu0 0.0
        %473 = vmatpush2.msra.mxu0 0.0
        %474 = vmatprep.mubr.f32.mxu0 0.0
        %475 = vmatmul.mubr.f32.gmra.mxu0 %v408
        %v476 = vpop.f32.mrf.mxu0
        %v477 = vadd.f32 0.0, %v476
        %v478 = vpop.f32.mrf.mxu0
        %479 = vdwg.mxu0
        %480 = vst.msk [vmem:[%s306] sm:$0xff] %vm317, %v477
        %s481 = sand.u32 %s130, 1
        %s482 = scalar_lea.sflag [#allocation4], %s481
        %s483 = sand.u32 %s130, 1
        %s484 = smul.addr %s483, 8
        %s485 = scalar_lea.vmem [#allocation8], %s484
        %s486 = sand.u32 %s158, 1
        %s487 = scalar_lea.sflag [#allocation10], %s486
        %s488 = sand.u32 %s158, 1
        %s489 = smul.addr %s488, 8
        %s490 = scalar_lea.vmem [#allocation9], %s489
        // Predicated region
        $region45: #{dot_product_attention.1} parent=31 // pred_check
          %p491 = pneg %p140
        $region46: #{dot_product_attention.1} parent=31 // pred_check_branch
          %493 = sbr.rel (%p491) target = $region48
        $region47: #{dot_product_attention.1} parent=31 // pred_region
          %s495 = ssub.s32 128, 128
          %496 = vsyncadd %s482, %s495
          %s497 = sadd.s32 %s33, %s32
          %s498 = smul.addr %s497, 128
          %s499 = scalar_lea.hbm %s3, %s498
          %s501 = sshll.u32 %s485, 4
          %s502 = int_to_ptr.vmem [resolvable:$true] %s501
          %504 = dma.vmem_to_hbm [thread:$0]  %s502, 128, %s499, %s482
        $region48: #{dot_product_attention.1} parent=31 // pred_fallthru
          _
        // Predicated region
        $region49: #{dot_product_attention.1} parent=31 // pred_check
          %p505 = pneg %p168
        $region50: #{dot_product_attention.1} parent=31 // pred_check_branch
          %507 = sbr.rel (%p505) target = $region52
        $region51: #{dot_product_attention.1} parent=31 // pred_region
          %s509 = ssub.s32 128, 128
          %510 = vsyncadd %s487, %s509
          %s511 = sadd.s32 %s33, %s32
          %s512 = smul.addr %s511, 128
          %s513 = scalar_lea.hbm %s4, %s512
          %s515 = sshll.u32 %s490, 4
          %s516 = int_to_ptr.vmem [resolvable:$true] %s515
          %518 = dma.vmem_to_hbm [thread:$0]  %s516, 128, %s513, %s487
        $region52: #{dot_product_attention.1} parent=31 // pred_fallthru
          _
      $region32: #{dot_product_attention.1} parent=5 // pred_fallthru
        _
      %p519 = scmp.le.s32.totalorder 2, %s23
      // Predicated region
      $region53: #{dot_product_attention.1} parent=5 // pred_check
        %p520 = pneg %p519
      $region54: #{dot_product_attention.1} parent=5 // pred_check_branch
        %522 = sbr.rel (%p520) target = $region56
      $region55: #{dot_product_attention.1} parent=5 // pred_region
        %s523 = ssub.s32 %s23, 2
        // Predicated region
        $region57: #{dot_product_attention.1} parent=55 // pred_check
          %p524 = pneg %p146
        $region58: #{dot_product_attention.1} parent=55 // pred_check_branch
          %526 = sbr.rel (%p524) target = $region60
        $region59: #{dot_product_attention.1} parent=55 // pred_region
          %s527 = sand.u32 %s131, 1
          %s528 = scalar_lea.sflag [#allocation4], %s527
          %s529 = sand.u32 %s131, 1
          %s530 = smul.addr %s529, 8
          %s531 = scalar_lea.vmem [#allocation8], %s530
          %532 = dma.done %s528, 128
        $region60: #{dot_product_attention.1} parent=55 // pred_fallthru
          _
        // Predicated region
        $region61: #{dot_product_attention.1} parent=55 // pred_check
          %p533 = pneg %p174
        $region62: #{dot_product_attention.1} parent=55 // pred_check_branch
          %535 = sbr.rel (%p533) target = $region64
        $region63: #{dot_product_attention.1} parent=55 // pred_region
          %s536 = sand.u32 %s159, 1
          %s537 = scalar_lea.sflag [#allocation10], %s536
          %s538 = sand.u32 %s159, 1
          %s539 = smul.addr %s538, 8
          %s540 = scalar_lea.vmem [#allocation9], %s539
          %541 = dma.done %s537, 128
        $region64: #{dot_product_attention.1} parent=55 // pred_fallthru
          _
      $region56: #{dot_product_attention.1} parent=5 // pred_fallthru
        _
    $region6: #{dot_product_attention.1} parent=1 // loop_footer
      %s27 = sadd.s32 1, %s23
    $region7: #{dot_product_attention.1} parent=1 // loop_footer_branch
      %22 = sbr.rel target = $region3
    $region8: #{dot_product_attention.1} parent=1 // loop_exit
      _
    %542 = vsyncpa [#allocation3], 1
    %s543 = scalar_lea.sflag [#allocation3], 1
    %544 = vsyncpa %s543, 1
    %545 = vsyncpa [#allocation6], 1
    %s546 = scalar_lea.sflag [#allocation6], 1
    %547 = vsyncpa %s546, 1
    %548 = vsyncpa [#allocation4], 1
    %s549 = scalar_lea.sflag [#allocation4], 1
    %550 = vsyncpa %s549, 1
    %551 = vsyncpa [#allocation10], 1
    %s552 = scalar_lea.sflag [#allocation10], 1
    %553 = vsyncpa %s552, 1

</llo_original>
